<compile_context>
chip_gen: v6e
topology: v6e:2x2x1
jax: 0.10.0
libtpu: 0.0.40
codegen_flags: <defaults>
</compile_context>

<pallas_src>
import functools

import jax
import jax.numpy as jnp
from jax.experimental import pallas as pl
from jax.experimental.pallas import tpu as pltpu


def channel_attention_kernel(x_ref, w1_ref, w2_ref, o_ref, *, inv_hw):
    # x_ref: (Bt, C, HWp) in the input dtype (spatial padded with zeros)
    # w1_ref: (C//r, C), w2_ref: (C, C//r)   (torch nn.Linear weight layout)
    x = x_ref[...]                                                # (Bt, C, HWp)

    # AdaptiveAvgPool2d(1): f32-accumulated spatial mean; padded lanes are
    # zero so the sum is exact, divide by the true H*W.
    avg = jnp.sum(x, axis=2, dtype=jnp.float32) * inv_hw          # (Bt, C), C on lanes

    # Tiny FC path entirely on the VPU in f32 (MXU at free-dim ~1 is pure
    # overhead and adds MRF-drain latency on the serial path).
    w1 = w1_ref[...].astype(jnp.float32)                          # (Cr, C)
    w2 = w2_ref[...].astype(jnp.float32)                          # (C, Cr)
    # fc1 (no bias) + ReLU:  h[b, r] = sum_c avg[b, c] * w1[r, c]
    h = jnp.maximum(jnp.sum(avg[:, None, :] * w1[None, :, :], axis=2), 0.0)   # (Bt, Cr)
    # fc2 (no bias) + Sigmoid:  y[b, c] = sum_r h[b, r] * w2[c, r]
    y = jax.nn.sigmoid(jnp.sum(h[:, None, :] * w2[None, :, :], axis=2))       # (Bt, C)

    # Scale: broadcast per-channel gate over the spatial lanes; store in the
    # input dtype (no full-tile f32 copy).
    o_ref[...] = x * y.astype(x.dtype)[:, :, None]


def channel_attention(x, w1, w2, *, target_block_bytes=4 << 20):
    """x: (B, C, H, W) NCHW.  w1: (C//r, C), w2: (C, C//r)."""
    B, C, H, W = x.shape
    HW = H * W
    Cr = w1.shape[0]

    x_flat = x.reshape(B, C, HW)

    # Pad the spatial (lane) dim to a multiple of 128 -> unmasked vector stores.
    HWp = ((HW + 127) // 128) * 128
    if HWp != HW:
        x_flat = jnp.pad(x_flat, ((0, 0), (0, 0), (0, HWp - HW)))

    # Largest divisor of B keeping one block <= target_block_bytes (>= 1).
    itemsize = jnp.dtype(x.dtype).itemsize
    bt = 1
    for cand in range(1, B + 1):
        if B % cand == 0 and cand * C * HWp * itemsize <= target_block_bytes:
            bt = cand

    kernel = functools.partial(channel_attention_kernel, inv_hw=1.0 / HW)

    out_flat = pl.pallas_call(
        kernel,
        out_shape=jax.ShapeDtypeStruct((B, C, HWp), x.dtype),
        grid_spec=pltpu.PrefetchScalarGridSpec(
            num_scalar_prefetch=0,
            grid=(B // bt,),
            in_specs=[
                # Bt batch elements per grid step, lane-dense spatial tiles.
                pl.BlockSpec((bt, C, HWp), lambda b: (b, 0, 0)),
                # Small weights: full-array blocks, same for every grid step.
                pl.BlockSpec((Cr, C), lambda b: (0, 0)),
                pl.BlockSpec((C, Cr), lambda b: (0, 0)),
            ],
            out_specs=pl.BlockSpec((bt, C, HWp), lambda b: (b, 0, 0)),
        ),
        compiler_params=pltpu.CompilerParams(
            dimension_semantics=("parallel",)),
    )(x_flat, w1, w2)

    if HWp != HW:
        out_flat = out_flat[:, :, :HW]
    return out_flat.reshape(B, C, H, W)


def channel_attention_ref(x, w1, w2):
    """Pure-JAX reference mirroring the PyTorch forward (full-precision dots)."""
    avg = jnp.mean(x.astype(jnp.float32), axis=(2, 3))                        # (B, C)
    h = jnp.maximum(
        jnp.einsum("bc,rc->br", avg, w1, precision=jax.lax.Precision.HIGHEST), 0.0)
    y = jax.nn.sigmoid(
        jnp.einsum("br,cr->bc", h, w2, precision=jax.lax.Precision.HIGHEST))  # (B, C)
    return x * y.astype(x.dtype)[:, :, None, None]


if __name__ == "__main__":
    # Module params: channel=32, reduction=16  =>  hidden = 2
    B, C, H, W = 2, 32, 16, 16
    reduction = 16
    Cr = C // reduction

    key = jax.random.PRNGKey(0)
    kx, k1, k2 = jax.random.split(key, 3)

    x = jax.random.normal(kx, (B, C, H, W), dtype=jnp.float32)
    # nn.Linear(channel, channel//r, bias=False) / nn.Linear(channel//r, channel, bias=False)
    w1 = jax.random.normal(k1, (Cr, C), dtype=jnp.float32) * 0.1
    w2 = jax.random.normal(k2, (C, Cr), dtype=jnp.float32) * 0.1

    out = channel_attention(x, w1, w2)
    out = jax.block_until_ready(out)

    ref = channel_attention_ref(x, w1, w2)
    assert out.shape == (B, C, H, W)
    assert jnp.allclose(out, ref, atol=1e-5, rtol=1e-5)

    print("KERNEL_OK")
</pallas_src>

<mosaic_0001>
module attributes {stable_mosaic.version = 11 : i64} {
  func.func @channel_attention_kernel(%arg0: i32, %arg1: memref<2x32x256xf32, #tpu.memory_space<vmem>>, %arg2: memref<2x32xf32, #tpu.memory_space<vmem>>, %arg3: memref<32x2xf32, #tpu.memory_space<vmem>>, %arg4: memref<2x32x256xf32, #tpu.memory_space<vmem>>) attributes {dimension_semantics = [#tpu.dimension_semantics<parallel>], iteration_bounds = array<i64: 1>, scalar_prefetch = 0 : i64, scratch_operands = 0 : i64, tpu.core_type = #tpu.core_type<tc>, window_params = [{transform_indices = @transform_0, window_bounds = array<i64: 2, 32, 256>}, {pipeline_mode = #tpu.pipeline_mode<synchronous>, transform_indices = @transform_1, window_bounds = array<i64: 2, 32>}, {pipeline_mode = #tpu.pipeline_mode<synchronous>, transform_indices = @transform_2, window_bounds = array<i64: 32, 2>}, {transform_indices = @transform_3, window_bounds = array<i64: 2, 32, 256>}]} {
    %c0 = arith.constant 0 : index
    %c0_0 = arith.constant 0 : index
    %c0_1 = arith.constant 0 : index
    %0 = vector.load %arg1[%c0, %c0_0, %c0_1] : memref<2x32x256xf32, #tpu.memory_space<vmem>>, vector<2x32x256xf32>
    %cst = arith.constant dense<0.000000e+00> : vector<2x32xf32>
    %1 = vector.multi_reduction <add>, %0, %cst [2] : vector<2x32x256xf32> to vector<2x32xf32>
    %cst_2 = arith.constant 3.906250e-03 : f32
    %2 = vector.broadcast %cst_2 : f32 to vector<2x32xf32>
    %3 = arith.mulf %1, %2 : vector<2x32xf32>
    %c0_3 = arith.constant 0 : index
    %c0_4 = arith.constant 0 : index
    %4 = vector.load %arg2[%c0_3, %c0_4] : memref<2x32xf32, #tpu.memory_space<vmem>>, vector<2x32xf32>
    %c0_5 = arith.constant 0 : index
    %c0_6 = arith.constant 0 : index
    %5 = vector.load %arg3[%c0_5, %c0_6] : memref<32x2xf32, #tpu.memory_space<vmem>>, vector<32x2xf32>
    %6 = vector.shape_cast %3 : vector<2x32xf32> to vector<2x1x32xf32>
    %7 = vector.shape_cast %4 : vector<2x32xf32> to vector<1x2x32xf32>
    %8 = vector.broadcast %6 : vector<2x1x32xf32> to vector<2x2x32xf32>
    %9 = vector.broadcast %7 : vector<1x2x32xf32> to vector<2x2x32xf32>
    %10 = arith.mulf %8, %9 : vector<2x2x32xf32>
    %cst_7 = arith.constant dense<0.000000e+00> : vector<2x2xf32>
    %11 = vector.multi_reduction <add>, %10, %cst_7 [2] : vector<2x2x32xf32> to vector<2x2xf32>
    %cst_8 = arith.constant 0.000000e+00 : f32
    %12 = vector.broadcast %cst_8 : f32 to vector<2x2xf32>
    %13 = arith.maximumf %11, %12 : vector<2x2xf32>
    %14 = vector.shape_cast %13 : vector<2x2xf32> to vector<2x1x2xf32>
    %15 = vector.shape_cast %5 : vector<32x2xf32> to vector<1x32x2xf32>
    %16 = vector.broadcast %14 : vector<2x1x2xf32> to vector<2x32x2xf32>
    %17 = vector.broadcast %15 : vector<1x32x2xf32> to vector<2x32x2xf32>
    %18 = arith.mulf %16, %17 : vector<2x32x2xf32>
    %cst_9 = arith.constant dense<0.000000e+00> : vector<2x32xf32>
    %19 = vector.multi_reduction <add>, %18, %cst_9 [2] : vector<2x32x2xf32> to vector<2x32xf32>
    %20 = arith.negf %19 : vector<2x32xf32>
    %21 = math.exp %20 : vector<2x32xf32>
    %cst_10 = arith.constant 1.000000e+00 : f32
    %22 = vector.broadcast %cst_10 : f32 to vector<2x32xf32>
    %23 = arith.addf %22, %21 : vector<2x32xf32>
    %24 = arith.divf %22, %23 : vector<2x32xf32>
    %25 = vector.shape_cast %24 : vector<2x32xf32> to vector<2x32x1xf32>
    %26 = vector.broadcast %25 : vector<2x32x1xf32> to vector<2x32x256xf32>
    %27 = arith.mulf %0, %26 : vector<2x32x256xf32>
    %c0_11 = arith.constant 0 : index
    %c0_12 = arith.constant 0 : index
    %c0_13 = arith.constant 0 : index
    %28 = vector.load %arg4[%c0_11, %c0_12, %c0_13] : memref<2x32x256xf32, #tpu.memory_space<vmem>>, vector<2x32x256xf32>
    tpu.vector_store %arg4[%c0_11, %c0_12, %c0_13], %27 {strides = array<i32>} : memref<2x32x256xf32, #tpu.memory_space<vmem>>, vector<2x32x256xf32>,
    return
  }
  func.func @transform_0(%arg0: i32) -> (i32, i32, i32) {
    %c0_i32 = arith.constant 0 : i32
    %c0_i32_0 = arith.constant 0 : i32
    %c0_i32_1 = arith.constant 0 : i32
    return %arg0, %c0_i32, %c0_i32_0 : i32, i32, i32
  }
  func.func @transform_1(%arg0: i32) -> (i32, i32) {
    %c0_i32 = arith.constant 0 : i32
    %c0_i32_0 = arith.constant 0 : i32
    %c0_i32_1 = arith.constant 0 : i32
    return %c0_i32, %c0_i32_0 : i32, i32
  }
  func.func @transform_2(%arg0: i32) -> (i32, i32) {
    %c0_i32 = arith.constant 0 : i32
    %c0_i32_0 = arith.constant 0 : i32
    %c0_i32_1 = arith.constant 0 : i32
    return %c0_i32, %c0_i32_0 : i32, i32
  }
  func.func @transform_3(%arg0: i32) -> (i32, i32, i32) {
    %c0_i32 = arith.constant 0 : i32
    %c0_i32_0 = arith.constant 0 : i32
    %c0_i32_1 = arith.constant 0 : i32
    return %arg0, %c0_i32, %c0_i32_0 : i32, i32, i32
  }
}

</mosaic_0001>

<llo_original>
// kernel: tpu_custom_call.1
$region0: #{tpu_custom_call.1}
  #allocation0 [shape = 'u32[]', space=smem, size = 0x4, offset = 0x4, fixed_abs, tag = 'smem constant byte address 0x4 - core index']
  #allocation1 [shape = 'u32[144,128]{1,0:T(1,128)}', space=vmem, size = 0x12000, scoped, tag = 'internal scratch']
  %s0 = inlined_call_operand.hbm [shape: f32[2,32,256], index: 0, kind: input, shape index: {}]
  %s1 = inlined_call_operand.vmem [shape: f32[2,32], index: 1, kind: input, shape index: {}]
  %s2 = inlined_call_operand.vmem [shape: f32[32,2], index: 2, kind: input, shape index: {}]
  %s3 = inlined_call_operand.hbm [shape: f32[2,32,256], index: 3, kind: output, shape index: {}]
  %s4 = sld [smem:[#allocation0]]
  $region26: #{tpu_custom_call.1} parent=0
    _
  %s6 = ssub.s32 1, %s4
  %s7 = scalar_select 0, %s6, %s4
  $region1: #{tpu_custom_call.1} parent=0
    #allocation2 [shape = 'u8[65536]{0}', space=vmem, size = 0x10000, scoped, tag = 'input window, operand 0, single buffered']
    #allocation3 [shape = 's32[1]{0}', space=sflag, size = 0x4, scoped, tag = 'scoped memory for tpu_custom_call.1']
    #allocation4 [shape = 's32[1]{0}', space=sflag, size = 0x4, scoped, tag = 'scoped memory for tpu_custom_call.1']
    #allocation5 [shape = 'u8[65536]{0}', space=vmem, size = 0x10000, scoped, tag = 'output window, operand 0, single buffered']
    %8 = vsyncpa [#allocation3], 0
    %9 = vsyncpa [#allocation4], 0
    // Predicated region
    $region2: #{tpu_custom_call.1} parent=1 // pred_check
      _
    $region3: #{tpu_custom_call.1} parent=1 // pred_check_branch
      %11 = sbr.rel (0) target = $region5
    $region4: #{tpu_custom_call.1} parent=1 // pred_region
      %s13 = ssub.s32 2048, 2048
      %14 = vsyncadd [#allocation3], %s13
      %s15 = sshll.u32 [#allocation2], 4
      %s16 = int_to_ptr.vmem [resolvable:$true] %s15
      %21 = dma.hbm_to_vmem [thread:$0]  %s0, 2048, %s16, [#allocation3], 256, 256, 16
    $region5: #{tpu_custom_call.1} parent=1 // pred_fallthru
      _
    // Predicated region
    $region6: #{tpu_custom_call.1} parent=1 // pred_check
      _
    $region7: #{tpu_custom_call.1} parent=1 // pred_check_branch
      %23 = sbr.rel (0) target = $region9
    $region8: #{tpu_custom_call.1} parent=1 // pred_region
      _
    $region9: #{tpu_custom_call.1} parent=1 // pred_fallthru
      _
    // Predicated region
    $region10: #{tpu_custom_call.1} parent=1 // pred_check
      _
    $region11: #{tpu_custom_call.1} parent=1 // pred_check_branch
      %25 = sbr.rel (0) target = $region13
    $region12: #{tpu_custom_call.1} parent=1 // pred_region
      _
    $region13: #{tpu_custom_call.1} parent=1 // pred_fallthru
      _
    // Predicated region
    $region14: #{tpu_custom_call.1} parent=1 // pred_check
      _
    $region15: #{tpu_custom_call.1} parent=1 // pred_check_branch
      %27 = sbr.rel (0) target = $region17
    $region16: #{tpu_custom_call.1} parent=1 // pred_region
      %28 = dma.done [#allocation3], 2048
    $region17: #{tpu_custom_call.1} parent=1 // pred_fallthru
      _
    %v29 = vld [vmem:[#allocation2] sm:$0xff]
    %v30 = vld [vmem:[#allocation2 + $0x8] sm:$0xff]
    %v31 = vld [vmem:[#allocation2 + $0x10] sm:$0xff]
    %v32 = vld [vmem:[#allocation2 + $0x18] sm:$0xff]
    %v33 = vld [vmem:[#allocation2 + $0x20] sm:$0xff]
    %v34 = vld [vmem:[#allocation2 + $0x28] sm:$0xff]
    %v35 = vld [vmem:[#allocation2 + $0x30] sm:$0xff]
    %v36 = vld [vmem:[#allocation2 + $0x38] sm:$0xff]
    %v37 = vld [vmem:[#allocation2 + $0x40] sm:$0xff]
    %v38 = vld [vmem:[#allocation2 + $0x48] sm:$0xff]
    %v39 = vld [vmem:[#allocation2 + $0x50] sm:$0xff]
    %v40 = vld [vmem:[#allocation2 + $0x58] sm:$0xff]
    %v41 = vld [vmem:[#allocation2 + $0x60] sm:$0xff]
    %v42 = vld [vmem:[#allocation2 + $0x68] sm:$0xff]
    %v43 = vld [vmem:[#allocation2 + $0x70] sm:$0xff]
    %v44 = vld [vmem:[#allocation2 + $0x78] sm:$0xff]
    %v45 = vadd.f32 %v29, %v30
    %46 = vadd.xlane.f32.xlu0 %v45
    %v47 = vpop.xlane.xlu0 %46
    %v48 = vadd.f32 %v31, %v32
    %49 = vadd.xlane.f32.xlu0 %v48
    %v50 = vpop.xlane.xlu0 %49
    %v51 = vadd.f32 %v33, %v34
    %52 = vadd.xlane.f32.xlu0 %v51
    %v53 = vpop.xlane.xlu0 %52
    %v54 = vadd.f32 %v35, %v36
    %55 = vadd.xlane.f32.xlu0 %v54
    %v56 = vpop.xlane.xlu0 %55
    %v57 = vadd.f32 %v37, %v38
    %58 = vadd.xlane.f32.xlu0 %v57
    %v59 = vpop.xlane.xlu0 %58
    %v60 = vadd.f32 %v39, %v40
    %61 = vadd.xlane.f32.xlu0 %v60
    %v62 = vpop.xlane.xlu0 %61
    %v63 = vadd.f32 %v41, %v42
    %64 = vadd.xlane.f32.xlu0 %v63
    %v65 = vpop.xlane.xlu0 %64
    %v66 = vadd.f32 %v43, %v44
    %67 = vadd.xlane.f32.xlu0 %v66
    %v68 = vpop.xlane.xlu0 %67
    %v69 = vmul.f32 %v47, 0.00390625
    %v70 = vmul.f32 %v50, 0.00390625
    %v71 = vmul.f32 %v53, 0.00390625
    %v72 = vmul.f32 %v56, 0.00390625
    %v73 = vmul.f32 %v59, 0.00390625
    %v74 = vmul.f32 %v62, 0.00390625
    %v75 = vmul.f32 %v65, 0.00390625
    %v76 = vmul.f32 %v68, 0.00390625
    %v77 = vld [vmem:[%s1] sm:$0x3]
    %v78 = vld [vmem:[%s2] sm:$0xff]
    %v79 = vld [vmem:[%s2 + $0x8] sm:$0xff]
    %v80 = vld [vmem:[%s2 + $0x10] sm:$0xff]
    %v81 = vld [vmem:[%s2 + $0x18] sm:$0xff]
    %v83 = vlaneseq
    %v84 = vshrl.u32 %v83, 7
    %v85 = vsub.s32 0, %v84
    %v86 = vrot.slane %v77, %v85
    %88 = vbcast.lane.b32.xlu0 %v86, 256
    %v89 = vpop.permute.xlu0 %88
    %s91 = sor.u32 256, 8
    %92 = vbcast.lane.b32.xlu0 %v86, %s91
    %v93 = vpop.permute.xlu0 %92
    %s95 = sor.u32 256, 16
    %96 = vbcast.lane.b32.xlu0 %v86, %s95
    %v97 = vpop.permute.xlu0 %96
    %s99 = sor.u32 256, 24
    %100 = vbcast.lane.b32.xlu0 %v86, %s99
    %v101 = vpop.permute.xlu0 %100
    %v102 = vlaneseq
    %v103 = vshrl.u32 %v102, 7
    %v104 = vsub.s32 1, %v103
    %v105 = vrot.slane %v77, %v104
    %107 = vbcast.lane.b32.xlu0 %v105, 256
    %v108 = vpop.permute.xlu0 %107
    %s110 = sor.u32 256, 8
    %111 = vbcast.lane.b32.xlu0 %v105, %s110
    %v112 = vpop.permute.xlu0 %111
    %s114 = sor.u32 256, 16
    %115 = vbcast.lane.b32.xlu0 %v105, %s114
    %v116 = vpop.permute.xlu0 %115
    %s118 = sor.u32 256, 24
    %119 = vbcast.lane.b32.xlu0 %v105, %s118
    %v120 = vpop.permute.xlu0 %119
    %v129 = vmul.f32 %v69, %v89
    %v130 = vmul.f32 %v70, %v93
    %v131 = vmul.f32 %v71, %v97
    %v132 = vmul.f32 %v72, %v101
    %v133 = vmul.f32 %v69, %v108
    %v134 = vmul.f32 %v70, %v112
    %v135 = vmul.f32 %v71, %v116
    %v136 = vmul.f32 %v72, %v120
    %v137 = vmul.f32 %v73, %v89
    %v138 = vmul.f32 %v74, %v93
    %v139 = vmul.f32 %v75, %v97
    %v140 = vmul.f32 %v76, %v101
    %v141 = vmul.f32 %v73, %v108
    %v142 = vmul.f32 %v74, %v112
    %v143 = vmul.f32 %v75, %v116
    %v144 = vmul.f32 %v76, %v120
    %161 = vset.pattern.permute.xlu0 0
    %162 = vperm.xlu0 %161, %v129
    %v163 = vpop.permute.xlu0 %162
    %164 = vset.pattern.permute.xlu0 0
    %165 = vperm.xlu0 %164, %v130
    %v166 = vpop.permute.xlu0 %165
    %167 = vset.pattern.permute.xlu0 0
    %168 = vperm.xlu0 %167, %v131
    %v169 = vpop.permute.xlu0 %168
    %170 = vset.pattern.permute.xlu0 0
    %171 = vperm.xlu0 %170, %v132
    %v172 = vpop.permute.xlu0 %171
    %173 = vset.pattern.permute.xlu0 0
    %174 = vperm.xlu0 %173, %v133
    %v175 = vpop.permute.xlu0 %174
    %176 = vset.pattern.permute.xlu0 0
    %177 = vperm.xlu0 %176, %v134
    %v178 = vpop.permute.xlu0 %177
    %179 = vset.pattern.permute.xlu0 0
    %180 = vperm.xlu0 %179, %v135
    %v181 = vpop.permute.xlu0 %180
    %182 = vset.pattern.permute.xlu0 0
    %183 = vperm.xlu0 %182, %v136
    %v184 = vpop.permute.xlu0 %183
    %185 = vset.pattern.permute.xlu0 0
    %186 = vperm.xlu0 %185, %v137
    %v187 = vpop.permute.xlu0 %186
    %188 = vset.pattern.permute.xlu0 0
    %189 = vperm.xlu0 %188, %v138
    %v190 = vpop.permute.xlu0 %189
    %191 = vset.pattern.permute.xlu0 0
    %192 = vperm.xlu0 %191, %v139
    %v193 = vpop.permute.xlu0 %192
    %194 = vset.pattern.permute.xlu0 0
    %195 = vperm.xlu0 %194, %v140
    %v196 = vpop.permute.xlu0 %195
    %197 = vset.pattern.permute.xlu0 0
    %198 = vperm.xlu0 %197, %v141
    %v199 = vpop.permute.xlu0 %198
    %200 = vset.pattern.permute.xlu0 0
    %201 = vperm.xlu0 %200, %v142
    %v202 = vpop.permute.xlu0 %201
    %203 = vset.pattern.permute.xlu0 0
    %204 = vperm.xlu0 %203, %v143
    %v205 = vpop.permute.xlu0 %204
    %206 = vset.pattern.permute.xlu0 0
    %207 = vperm.xlu0 %206, %v144
    %v208 = vpop.permute.xlu0 %207
    %v209 = vlaneseq
    %v210 = vand.u32 %v209, 127
    %v211 = vlaneseq
    %v212 = vshrl.u32 %v211, 7
    %v213 = vsub.s32 %v210, %v212
    %v214 = vrot.slane %v163, %v213
    %v215 = vadd.s32 %v210, 4294967288
    %v216 = vlaneseq
    %v217 = vshrl.u32 %v216, 7
    %v218 = vsub.s32 %v215, %v217
    %v219 = vrot.slane %v166, %v218
    %vm220 = vcmask 130112
    %v221 = vsel %vm220, %v219, %v214
    %v222 = vadd.s32 %v210, 4294967280
    %v223 = vlaneseq
    %v224 = vshrl.u32 %v223, 7
    %v225 = vsub.s32 %v222, %v224
    %v226 = vrot.slane %v169, %v225
    %vm227 = vcmask 195712
    %v228 = vsel %vm227, %v226, %v221
    %v229 = vadd.s32 %v210, 4294967272
    %v230 = vlaneseq
    %v231 = vshrl.u32 %v230, 7
    %v232 = vsub.s32 %v229, %v231
    %v233 = vrot.slane %v172, %v232
    %vm234 = vcmask 261312
    %v235 = vsel %vm234, %v233, %v228
    %v236 = vlaneseq
    %v237 = vshrl.u32 %v236, 7
    %v238 = vsub.s32 %v210, %v237
    %v239 = vrot.slane %v175, %v238
    %v240 = vlaneseq
    %v241 = vshrl.u32 %v240, 7
    %v242 = vsub.s32 %v215, %v241
    %v243 = vrot.slane %v178, %v242
    %v244 = vsel %vm220, %v243, %v239
    %v245 = vlaneseq
    %v246 = vshrl.u32 %v245, 7
    %v247 = vsub.s32 %v222, %v246
    %v248 = vrot.slane %v181, %v247
    %v249 = vsel %vm227, %v248, %v244
    %v250 = vlaneseq
    %v251 = vshrl.u32 %v250, 7
    %v252 = vsub.s32 %v229, %v251
    %v253 = vrot.slane %v184, %v252
    %v254 = vsel %vm234, %v253, %v249
    %v255 = vlaneseq
    %v256 = vshrl.u32 %v255, 7
    %v257 = vsub.s32 %v210, %v256
    %v258 = vrot.slane %v187, %v257
    %v259 = vlaneseq
    %v260 = vshrl.u32 %v259, 7
    %v261 = vsub.s32 %v215, %v260
    %v262 = vrot.slane %v190, %v261
    %v263 = vsel %vm220, %v262, %v258
    %v264 = vlaneseq
    %v265 = vshrl.u32 %v264, 7
    %v266 = vsub.s32 %v222, %v265
    %v267 = vrot.slane %v193, %v266
    %v268 = vsel %vm227, %v267, %v263
    %v269 = vlaneseq
    %v270 = vshrl.u32 %v269, 7
    %v271 = vsub.s32 %v229, %v270
    %v272 = vrot.slane %v196, %v271
    %v273 = vsel %vm234, %v272, %v268
    %v274 = vlaneseq
    %v275 = vshrl.u32 %v274, 7
    %v276 = vsub.s32 %v210, %v275
    %v277 = vrot.slane %v199, %v276
    %v278 = vlaneseq
    %v279 = vshrl.u32 %v278, 7
    %v280 = vsub.s32 %v215, %v279
    %v281 = vrot.slane %v202, %v280
    %v282 = vsel %vm220, %v281, %v277
    %v283 = vlaneseq
    %v284 = vshrl.u32 %v283, 7
    %v285 = vsub.s32 %v222, %v284
    %v286 = vrot.slane %v205, %v285
    %v287 = vsel %vm227, %v286, %v282
    %v288 = vlaneseq
    %v289 = vshrl.u32 %v288, 7
    %v290 = vsub.s32 %v229, %v289
    %v291 = vrot.slane %v208, %v290
    %v292 = vsel %vm234, %v291, %v287
    %vm293 = vcmask 1041409
    %v294 = vsel %vm293, %v254, %v235
    %v295 = vsel %vm293, %v292, %v273
    %vm298 = vcmask 254976
    %v299 = vsel %vm298, %v294, 0.0
    %300 = vadd.xlane.f32.xlu0 %v299
    %v301 = vpop.xlane.xlu0 %300
    %v302 = vsel %vm298, %v295, 0.0
    %303 = vadd.xlane.f32.xlu0 %v302
    %v304 = vpop.xlane.xlu0 %303
    %v305 = vmax.f32 %v301, 0.0
    %v306 = vmax.f32 %v304, 0.0
    %v311 = vlaneseq
    %v312 = vshrl.u32 %v311, 7
    %v313 = vsub.s32 0, %v312
    %v314 = vrot.slane %v78, %v313
    %316 = vbcast.lane.b32.xlu0 %v314, 256
    %v317 = vpop.permute.xlu0 %316
    %v318 = vlaneseq
    %v319 = vshrl.u32 %v318, 7
    %v320 = vsub.s32 1, %v319
    %v321 = vrot.slane %v78, %v320
    %323 = vbcast.lane.b32.xlu0 %v321, 256
    %v324 = vpop.permute.xlu0 %323
    %v325 = vlaneseq
    %v326 = vshrl.u32 %v325, 7
    %v327 = vsub.s32 2, %v326
    %v328 = vrot.slane %v78, %v327
    %330 = vbcast.lane.b32.xlu0 %v328, 256
    %v331 = vpop.permute.xlu0 %330
    %v332 = vlaneseq
    %v333 = vshrl.u32 %v332, 7
    %v334 = vsub.s32 3, %v333
    %v335 = vrot.slane %v78, %v334
    %337 = vbcast.lane.b32.xlu0 %v335, 256
    %v338 = vpop.permute.xlu0 %337
    %v339 = vlaneseq
    %v340 = vshrl.u32 %v339, 7
    %v341 = vsub.s32 4, %v340
    %v342 = vrot.slane %v78, %v341
    %344 = vbcast.lane.b32.xlu0 %v342, 256
    %v345 = vpop.permute.xlu0 %344
    %v346 = vlaneseq
    %v347 = vshrl.u32 %v346, 7
    %v348 = vsub.s32 5, %v347
    %v349 = vrot.slane %v78, %v348
    %351 = vbcast.lane.b32.xlu0 %v349, 256
    %v352 = vpop.permute.xlu0 %351
    %v353 = vlaneseq
    %v354 = vshrl.u32 %v353, 7
    %v355 = vsub.s32 6, %v354
    %v356 = vrot.slane %v78, %v355
    %358 = vbcast.lane.b32.xlu0 %v356, 256
    %v359 = vpop.permute.xlu0 %358
    %v360 = vlaneseq
    %v361 = vshrl.u32 %v360, 7
    %v362 = vsub.s32 7, %v361
    %v363 = vrot.slane %v78, %v362
    %365 = vbcast.lane.b32.xlu0 %v363, 256
    %v366 = vpop.permute.xlu0 %365
    %v367 = vlaneseq
    %v368 = vshrl.u32 %v367, 7
    %v369 = vsub.s32 0, %v368
    %v370 = vrot.slane %v79, %v369
    %372 = vbcast.lane.b32.xlu0 %v370, 256
    %v373 = vpop.permute.xlu0 %372
    %v374 = vlaneseq
    %v375 = vshrl.u32 %v374, 7
    %v376 = vsub.s32 1, %v375
    %v377 = vrot.slane %v79, %v376
    %379 = vbcast.lane.b32.xlu0 %v377, 256
    %v380 = vpop.permute.xlu0 %379
    %v381 = vlaneseq
    %v382 = vshrl.u32 %v381, 7
    %v383 = vsub.s32 2, %v382
    %v384 = vrot.slane %v79, %v383
    %386 = vbcast.lane.b32.xlu0 %v384, 256
    %v387 = vpop.permute.xlu0 %386
    %v388 = vlaneseq
    %v389 = vshrl.u32 %v388, 7
    %v390 = vsub.s32 3, %v389
    %v391 = vrot.slane %v79, %v390
    %393 = vbcast.lane.b32.xlu0 %v391, 256
    %v394 = vpop.permute.xlu0 %393
    %v395 = vlaneseq
    %v396 = vshrl.u32 %v395, 7
    %v397 = vsub.s32 4, %v396
    %v398 = vrot.slane %v79, %v397
    %400 = vbcast.lane.b32.xlu0 %v398, 256
    %v401 = vpop.permute.xlu0 %400
    %v402 = vlaneseq
    %v403 = vshrl.u32 %v402, 7
    %v404 = vsub.s32 5, %v403
    %v405 = vrot.slane %v79, %v404
    %407 = vbcast.lane.b32.xlu0 %v405, 256
    %v408 = vpop.permute.xlu0 %407
    %v409 = vlaneseq
    %v410 = vshrl.u32 %v409, 7
    %v411 = vsub.s32 6, %v410
    %v412 = vrot.slane %v79, %v411
    %414 = vbcast.lane.b32.xlu0 %v412, 256
    %v415 = vpop.permute.xlu0 %414
    %v416 = vlaneseq
    %v417 = vshrl.u32 %v416, 7
    %v418 = vsub.s32 7, %v417
    %v419 = vrot.slane %v79, %v418
    %421 = vbcast.lane.b32.xlu0 %v419, 256
    %v422 = vpop.permute.xlu0 %421
    %v423 = vlaneseq
    %v424 = vshrl.u32 %v423, 7
    %v425 = vsub.s32 0, %v424
    %v426 = vrot.slane %v80, %v425
    %428 = vbcast.lane.b32.xlu0 %v426, 256
    %v429 = vpop.permute.xlu0 %428
    %v430 = vlaneseq
    %v431 = vshrl.u32 %v430, 7
    %v432 = vsub.s32 1, %v431
    %v433 = vrot.slane %v80, %v432
    %435 = vbcast.lane.b32.xlu0 %v433, 256
    %v436 = vpop.permute.xlu0 %435
    %v437 = vlaneseq
    %v438 = vshrl.u32 %v437, 7
    %v439 = vsub.s32 2, %v438
    %v440 = vrot.slane %v80, %v439
    %442 = vbcast.lane.b32.xlu0 %v440, 256
    %v443 = vpop.permute.xlu0 %442
    %v444 = vlaneseq
    %v445 = vshrl.u32 %v444, 7
    %v446 = vsub.s32 3, %v445
    %v447 = vrot.slane %v80, %v446
    %449 = vbcast.lane.b32.xlu0 %v447, 256
    %v450 = vpop.permute.xlu0 %449
    %v451 = vlaneseq
    %v452 = vshrl.u32 %v451, 7
    %v453 = vsub.s32 4, %v452
    %v454 = vrot.slane %v80, %v453
    %456 = vbcast.lane.b32.xlu0 %v454, 256
    %v457 = vpop.permute.xlu0 %456
    %v458 = vlaneseq
    %v459 = vshrl.u32 %v458, 7
    %v460 = vsub.s32 5, %v459
    %v461 = vrot.slane %v80, %v460
    %463 = vbcast.lane.b32.xlu0 %v461, 256
    %v464 = vpop.permute.xlu0 %463
    %v465 = vlaneseq
    %v466 = vshrl.u32 %v465, 7
    %v467 = vsub.s32 6, %v466
    %v468 = vrot.slane %v80, %v467
    %470 = vbcast.lane.b32.xlu0 %v468, 256
    %v471 = vpop.permute.xlu0 %470
    %v472 = vlaneseq
    %v473 = vshrl.u32 %v472, 7
    %v474 = vsub.s32 7, %v473
    %v475 = vrot.slane %v80, %v474
    %477 = vbcast.lane.b32.xlu0 %v475, 256
    %v478 = vpop.permute.xlu0 %477
    %v479 = vlaneseq
    %v480 = vshrl.u32 %v479, 7
    %v481 = vsub.s32 0, %v480
    %v482 = vrot.slane %v81, %v481
    %484 = vbcast.lane.b32.xlu0 %v482, 256
    %v485 = vpop.permute.xlu0 %484
    %v486 = vlaneseq
    %v487 = vshrl.u32 %v486, 7
    %v488 = vsub.s32 1, %v487
    %v489 = vrot.slane %v81, %v488
    %491 = vbcast.lane.b32.xlu0 %v489, 256
    %v492 = vpop.permute.xlu0 %491
    %v493 = vlaneseq
    %v494 = vshrl.u32 %v493, 7
    %v495 = vsub.s32 2, %v494
    %v496 = vrot.slane %v81, %v495
    %498 = vbcast.lane.b32.xlu0 %v496, 256
    %v499 = vpop.permute.xlu0 %498
    %v500 = vlaneseq
    %v501 = vshrl.u32 %v500, 7
    %v502 = vsub.s32 3, %v501
    %v503 = vrot.slane %v81, %v502
    %505 = vbcast.lane.b32.xlu0 %v503, 256
    %v506 = vpop.permute.xlu0 %505
    %v507 = vlaneseq
    %v508 = vshrl.u32 %v507, 7
    %v509 = vsub.s32 4, %v508
    %v510 = vrot.slane %v81, %v509
    %512 = vbcast.lane.b32.xlu0 %v510, 256
    %v513 = vpop.permute.xlu0 %512
    %v514 = vlaneseq
    %v515 = vshrl.u32 %v514, 7
    %v516 = vsub.s32 5, %v515
    %v517 = vrot.slane %v81, %v516
    %519 = vbcast.lane.b32.xlu0 %v517, 256
    %v520 = vpop.permute.xlu0 %519
    %v521 = vlaneseq
    %v522 = vshrl.u32 %v521, 7
    %v523 = vsub.s32 6, %v522
    %v524 = vrot.slane %v81, %v523
    %526 = vbcast.lane.b32.xlu0 %v524, 256
    %v527 = vpop.permute.xlu0 %526
    %v528 = vlaneseq
    %v529 = vshrl.u32 %v528, 7
    %v530 = vsub.s32 7, %v529
    %v531 = vrot.slane %v81, %v530
    %533 = vbcast.lane.b32.xlu0 %v531, 256
    %v534 = vpop.permute.xlu0 %533
    %v567 = vmul.f32 %v305, %v317
    %v568 = vmul.f32 %v305, %v324
    %v569 = vmul.f32 %v305, %v331
    %v570 = vmul.f32 %v305, %v338
    %v571 = vmul.f32 %v305, %v345
    %v572 = vmul.f32 %v305, %v352
    %v573 = vmul.f32 %v305, %v359
    %v574 = vmul.f32 %v305, %v366
    %v575 = vmul.f32 %v305, %v373
    %v576 = vmul.f32 %v305, %v380
    %v577 = vmul.f32 %v305, %v387
    %v578 = vmul.f32 %v305, %v394
    %v579 = vmul.f32 %v305, %v401
    %v580 = vmul.f32 %v305, %v408
    %v581 = vmul.f32 %v305, %v415
    %v582 = vmul.f32 %v305, %v422
    %v583 = vmul.f32 %v305, %v429
    %v584 = vmul.f32 %v305, %v436
    %v585 = vmul.f32 %v305, %v443
    %v586 = vmul.f32 %v305, %v450
    %v587 = vmul.f32 %v305, %v457
    %v588 = vmul.f32 %v305, %v464
    %v589 = vmul.f32 %v305, %v471
    %v590 = vmul.f32 %v305, %v478
    %v591 = vmul.f32 %v305, %v485
    %v592 = vmul.f32 %v305, %v492
    %v593 = vmul.f32 %v305, %v499
    %v594 = vmul.f32 %v305, %v506
    %v595 = vmul.f32 %v305, %v513
    %v596 = vmul.f32 %v305, %v520
    %v597 = vmul.f32 %v305, %v527
    %v598 = vmul.f32 %v305, %v534
    %v599 = vmul.f32 %v306, %v317
    %v600 = vmul.f32 %v306, %v324
    %v601 = vmul.f32 %v306, %v331
    %v602 = vmul.f32 %v306, %v338
    %v603 = vmul.f32 %v306, %v345
    %v604 = vmul.f32 %v306, %v352
    %v605 = vmul.f32 %v306, %v359
    %v606 = vmul.f32 %v306, %v366
    %v607 = vmul.f32 %v306, %v373
    %v608 = vmul.f32 %v306, %v380
    %v609 = vmul.f32 %v306, %v387
    %v610 = vmul.f32 %v306, %v394
    %v611 = vmul.f32 %v306, %v401
    %v612 = vmul.f32 %v306, %v408
    %v613 = vmul.f32 %v306, %v415
    %v614 = vmul.f32 %v306, %v422
    %v615 = vmul.f32 %v306, %v429
    %v616 = vmul.f32 %v306, %v436
    %v617 = vmul.f32 %v306, %v443
    %v618 = vmul.f32 %v306, %v450
    %v619 = vmul.f32 %v306, %v457
    %v620 = vmul.f32 %v306, %v464
    %v621 = vmul.f32 %v306, %v471
    %v622 = vmul.f32 %v306, %v478
    %v623 = vmul.f32 %v306, %v485
    %v624 = vmul.f32 %v306, %v492
    %v625 = vmul.f32 %v306, %v499
    %v626 = vmul.f32 %v306, %v506
    %v627 = vmul.f32 %v306, %v513
    %v628 = vmul.f32 %v306, %v520
    %v629 = vmul.f32 %v306, %v527
    %v630 = vmul.f32 %v306, %v534
    %695 = vset.pattern.permute.xlu0 0
    %696 = vperm.xlu0 %695, %v567
    %v697 = vpop.permute.xlu0 %696
    %698 = vset.pattern.permute.xlu0 0
    %699 = vperm.xlu0 %698, %v568
    %v700 = vpop.permute.xlu0 %699
    %701 = vset.pattern.permute.xlu0 0
    %702 = vperm.xlu0 %701, %v569
    %v703 = vpop.permute.xlu0 %702
    %704 = vset.pattern.permute.xlu0 0
    %705 = vperm.xlu0 %704, %v570
    %v706 = vpop.permute.xlu0 %705
    %707 = vset.pattern.permute.xlu0 0
    %708 = vperm.xlu0 %707, %v571
    %v709 = vpop.permute.xlu0 %708
    %710 = vset.pattern.permute.xlu0 0
    %711 = vperm.xlu0 %710, %v572
    %v712 = vpop.permute.xlu0 %711
    %713 = vset.pattern.permute.xlu0 0
    %714 = vperm.xlu0 %713, %v573
    %v715 = vpop.permute.xlu0 %714
    %716 = vset.pattern.permute.xlu0 0
    %717 = vperm.xlu0 %716, %v574
    %v718 = vpop.permute.xlu0 %717
    %719 = vset.pattern.permute.xlu0 0
    %720 = vperm.xlu0 %719, %v575
    %v721 = vpop.permute.xlu0 %720
    %722 = vset.pattern.permute.xlu0 0
    %723 = vperm.xlu0 %722, %v576
    %v724 = vpop.permute.xlu0 %723
    %725 = vset.pattern.permute.xlu0 0
    %726 = vperm.xlu0 %725, %v577
    %v727 = vpop.permute.xlu0 %726
    %728 = vset.pattern.permute.xlu0 0
    %729 = vperm.xlu0 %728, %v578
    %v730 = vpop.permute.xlu0 %729
    %731 = vset.pattern.permute.xlu0 0
    %732 = vperm.xlu0 %731, %v579
    %v733 = vpop.permute.xlu0 %732
    %734 = vset.pattern.permute.xlu0 0
    %735 = vperm.xlu0 %734, %v580
    %v736 = vpop.permute.xlu0 %735
    %737 = vset.pattern.permute.xlu0 0
    %738 = vperm.xlu0 %737, %v581
    %v739 = vpop.permute.xlu0 %738
    %740 = vset.pattern.permute.xlu0 0
    %741 = vperm.xlu0 %740, %v582
    %v742 = vpop.permute.xlu0 %741
    %743 = vset.pattern.permute.xlu0 0
    %744 = vperm.xlu0 %743, %v583
    %v745 = vpop.permute.xlu0 %744
    %746 = vset.pattern.permute.xlu0 0
    %747 = vperm.xlu0 %746, %v584
    %v748 = vpop.permute.xlu0 %747
    %749 = vset.pattern.permute.xlu0 0
    %750 = vperm.xlu0 %749, %v585
    %v751 = vpop.permute.xlu0 %750
    %752 = vset.pattern.permute.xlu0 0
    %753 = vperm.xlu0 %752, %v586
    %v754 = vpop.permute.xlu0 %753
    %755 = vset.pattern.permute.xlu0 0
    %756 = vperm.xlu0 %755, %v587
    %v757 = vpop.permute.xlu0 %756
    %758 = vset.pattern.permute.xlu0 0
    %759 = vperm.xlu0 %758, %v588
    %v760 = vpop.permute.xlu0 %759
    %761 = vset.pattern.permute.xlu0 0
    %762 = vperm.xlu0 %761, %v589
    %v763 = vpop.permute.xlu0 %762
    %764 = vset.pattern.permute.xlu0 0
    %765 = vperm.xlu0 %764, %v590
    %v766 = vpop.permute.xlu0 %765
    %767 = vset.pattern.permute.xlu0 0
    %768 = vperm.xlu0 %767, %v591
    %v769 = vpop.permute.xlu0 %768
    %770 = vset.pattern.permute.xlu0 0
    %771 = vperm.xlu0 %770, %v592
    %v772 = vpop.permute.xlu0 %771
    %773 = vset.pattern.permute.xlu0 0
    %774 = vperm.xlu0 %773, %v593
    %v775 = vpop.permute.xlu0 %774
    %776 = vset.pattern.permute.xlu0 0
    %777 = vperm.xlu0 %776, %v594
    %v778 = vpop.permute.xlu0 %777
    %779 = vset.pattern.permute.xlu0 0
    %780 = vperm.xlu0 %779, %v595
    %v781 = vpop.permute.xlu0 %780
    %782 = vset.pattern.permute.xlu0 0
    %783 = vperm.xlu0 %782, %v596
    %v784 = vpop.permute.xlu0 %783
    %785 = vset.pattern.permute.xlu0 0
    %786 = vperm.xlu0 %785, %v597
    %v787 = vpop.permute.xlu0 %786
    %788 = vset.pattern.permute.xlu0 0
    %789 = vperm.xlu0 %788, %v598
    %v790 = vpop.permute.xlu0 %789
    %791 = vset.pattern.permute.xlu0 0
    %792 = vperm.xlu0 %791, %v599
    %v793 = vpop.permute.xlu0 %792
    %794 = vset.pattern.permute.xlu0 0
    %795 = vperm.xlu0 %794, %v600
    %v796 = vpop.permute.xlu0 %795
    %797 = vset.pattern.permute.xlu0 0
    %798 = vperm.xlu0 %797, %v601
    %v799 = vpop.permute.xlu0 %798
    %800 = vset.pattern.permute.xlu0 0
    %801 = vperm.xlu0 %800, %v602
    %v802 = vpop.permute.xlu0 %801
    %803 = vset.pattern.permute.xlu0 0
    %804 = vperm.xlu0 %803, %v603
    %v805 = vpop.permute.xlu0 %804
    %806 = vset.pattern.permute.xlu0 0
    %807 = vperm.xlu0 %806, %v604
    %v808 = vpop.permute.xlu0 %807
    %809 = vset.pattern.permute.xlu0 0
    %810 = vperm.xlu0 %809, %v605
    %v811 = vpop.permute.xlu0 %810
    %812 = vset.pattern.permute.xlu0 0
    %813 = vperm.xlu0 %812, %v606
    %v814 = vpop.permute.xlu0 %813
    %815 = vset.pattern.permute.xlu0 0
    %816 = vperm.xlu0 %815, %v607
    %v817 = vpop.permute.xlu0 %816
    %818 = vset.pattern.permute.xlu0 0
    %819 = vperm.xlu0 %818, %v608
    %v820 = vpop.permute.xlu0 %819
    %821 = vset.pattern.permute.xlu0 0
    %822 = vperm.xlu0 %821, %v609
    %v823 = vpop.permute.xlu0 %822
    %824 = vset.pattern.permute.xlu0 0
    %825 = vperm.xlu0 %824, %v610
    %v826 = vpop.permute.xlu0 %825
    %827 = vset.pattern.permute.xlu0 0
    %828 = vperm.xlu0 %827, %v611
    %v829 = vpop.permute.xlu0 %828
    %830 = vset.pattern.permute.xlu0 0
    %831 = vperm.xlu0 %830, %v612
    %v832 = vpop.permute.xlu0 %831
    %833 = vset.pattern.permute.xlu0 0
    %834 = vperm.xlu0 %833, %v613
    %v835 = vpop.permute.xlu0 %834
    %836 = vset.pattern.permute.xlu0 0
    %837 = vperm.xlu0 %836, %v614
    %v838 = vpop.permute.xlu0 %837
    %839 = vset.pattern.permute.xlu0 0
    %840 = vperm.xlu0 %839, %v615
    %v841 = vpop.permute.xlu0 %840
    %842 = vset.pattern.permute.xlu0 0
    %843 = vperm.xlu0 %842, %v616
    %v844 = vpop.permute.xlu0 %843
    %845 = vset.pattern.permute.xlu0 0
    %846 = vperm.xlu0 %845, %v617
    %v847 = vpop.permute.xlu0 %846
    %848 = vset.pattern.permute.xlu0 0
    %849 = vperm.xlu0 %848, %v618
    %v850 = vpop.permute.xlu0 %849
    %851 = vset.pattern.permute.xlu0 0
    %852 = vperm.xlu0 %851, %v619
    %v853 = vpop.permute.xlu0 %852
    %854 = vset.pattern.permute.xlu0 0
    %855 = vperm.xlu0 %854, %v620
    %v856 = vpop.permute.xlu0 %855
    %857 = vset.pattern.permute.xlu0 0
    %858 = vperm.xlu0 %857, %v621
    %v859 = vpop.permute.xlu0 %858
    %860 = vset.pattern.permute.xlu0 0
    %861 = vperm.xlu0 %860, %v622
    %v862 = vpop.permute.xlu0 %861
    %863 = vset.pattern.permute.xlu0 0
    %864 = vperm.xlu0 %863, %v623
    %v865 = vpop.permute.xlu0 %864
    %866 = vset.pattern.permute.xlu0 0
    %867 = vperm.xlu0 %866, %v624
    %v868 = vpop.permute.xlu0 %867
    %869 = vset.pattern.permute.xlu0 0
    %870 = vperm.xlu0 %869, %v625
    %v871 = vpop.permute.xlu0 %870
    %872 = vset.pattern.permute.xlu0 0
    %873 = vperm.xlu0 %872, %v626
    %v874 = vpop.permute.xlu0 %873
    %875 = vset.pattern.permute.xlu0 0
    %876 = vperm.xlu0 %875, %v627
    %v877 = vpop.permute.xlu0 %876
    %878 = vset.pattern.permute.xlu0 0
    %879 = vperm.xlu0 %878, %v628
    %v880 = vpop.permute.xlu0 %879
    %881 = vset.pattern.permute.xlu0 0
    %882 = vperm.xlu0 %881, %v629
    %v883 = vpop.permute.xlu0 %882
    %884 = vset.pattern.permute.xlu0 0
    %885 = vperm.xlu0 %884, %v630
    %v886 = vpop.permute.xlu0 %885
    %v887 = vlaneseq
    %v888 = vshrl.u32 %v887, 7
    %v889 = vsub.s32 %v210, %v888
    %v890 = vrot.slane %v697, %v889
    %v891 = vlaneseq
    %v892 = vshrl.u32 %v891, 7
    %v893 = vsub.s32 %v210, %v892
    %v894 = vrot.slane %v700, %v893
    %v895 = vlaneseq
    %v896 = vshrl.u32 %v895, 7
    %v897 = vsub.s32 %v210, %v896
    %v898 = vrot.slane %v703, %v897
    %v899 = vlaneseq
    %v900 = vshrl.u32 %v899, 7
    %v901 = vsub.s32 %v210, %v900
    %v902 = vrot.slane %v706, %v901
    %v903 = vlaneseq
    %v904 = vshrl.u32 %v903, 7
    %v905 = vsub.s32 %v210, %v904
    %v906 = vrot.slane %v709, %v905
    %v907 = vlaneseq
    %v908 = vshrl.u32 %v907, 7
    %v909 = vsub.s32 %v210, %v908
    %v910 = vrot.slane %v712, %v909
    %v911 = vlaneseq
    %v912 = vshrl.u32 %v911, 7
    %v913 = vsub.s32 %v210, %v912
    %v914 = vrot.slane %v715, %v913
    %v915 = vlaneseq
    %v916 = vshrl.u32 %v915, 7
    %v917 = vsub.s32 %v210, %v916
    %v918 = vrot.slane %v718, %v917
    %v919 = vlaneseq
    %v920 = vshrl.u32 %v919, 7
    %v921 = vsub.s32 %v210, %v920
    %v922 = vrot.slane %v721, %v921
    %v923 = vlaneseq
    %v924 = vshrl.u32 %v923, 7
    %v925 = vsub.s32 %v210, %v924
    %v926 = vrot.slane %v724, %v925
    %v927 = vlaneseq
    %v928 = vshrl.u32 %v927, 7
    %v929 = vsub.s32 %v210, %v928
    %v930 = vrot.slane %v727, %v929
    %v931 = vlaneseq
    %v932 = vshrl.u32 %v931, 7
    %v933 = vsub.s32 %v210, %v932
    %v934 = vrot.slane %v730, %v933
    %v935 = vlaneseq
    %v936 = vshrl.u32 %v935, 7
    %v937 = vsub.s32 %v210, %v936
    %v938 = vrot.slane %v733, %v937
    %v939 = vlaneseq
    %v940 = vshrl.u32 %v939, 7
    %v941 = vsub.s32 %v210, %v940
    %v942 = vrot.slane %v736, %v941
    %v943 = vlaneseq
    %v944 = vshrl.u32 %v943, 7
    %v945 = vsub.s32 %v210, %v944
    %v946 = vrot.slane %v739, %v945
    %v947 = vlaneseq
    %v948 = vshrl.u32 %v947, 7
    %v949 = vsub.s32 %v210, %v948
    %v950 = vrot.slane %v742, %v949
    %v951 = vlaneseq
    %v952 = vshrl.u32 %v951, 7
    %v953 = vsub.s32 %v210, %v952
    %v954 = vrot.slane %v745, %v953
    %v955 = vlaneseq
    %v956 = vshrl.u32 %v955, 7
    %v957 = vsub.s32 %v210, %v956
    %v958 = vrot.slane %v748, %v957
    %v959 = vlaneseq
    %v960 = vshrl.u32 %v959, 7
    %v961 = vsub.s32 %v210, %v960
    %v962 = vrot.slane %v751, %v961
    %v963 = vlaneseq
    %v964 = vshrl.u32 %v963, 7
    %v965 = vsub.s32 %v210, %v964
    %v966 = vrot.slane %v754, %v965
    %v967 = vlaneseq
    %v968 = vshrl.u32 %v967, 7
    %v969 = vsub.s32 %v210, %v968
    %v970 = vrot.slane %v757, %v969
    %v971 = vlaneseq
    %v972 = vshrl.u32 %v971, 7
    %v973 = vsub.s32 %v210, %v972
    %v974 = vrot.slane %v760, %v973
    %v975 = vlaneseq
    %v976 = vshrl.u32 %v975, 7
    %v977 = vsub.s32 %v210, %v976
    %v978 = vrot.slane %v763, %v977
    %v979 = vlaneseq
    %v980 = vshrl.u32 %v979, 7
    %v981 = vsub.s32 %v210, %v980
    %v982 = vrot.slane %v766, %v981
    %v983 = vlaneseq
    %v984 = vshrl.u32 %v983, 7
    %v985 = vsub.s32 %v210, %v984
    %v986 = vrot.slane %v769, %v985
    %v987 = vlaneseq
    %v988 = vshrl.u32 %v987, 7
    %v989 = vsub.s32 %v210, %v988
    %v990 = vrot.slane %v772, %v989
    %v991 = vlaneseq
    %v992 = vshrl.u32 %v991, 7
    %v993 = vsub.s32 %v210, %v992
    %v994 = vrot.slane %v775, %v993
    %v995 = vlaneseq
    %v996 = vshrl.u32 %v995, 7
    %v997 = vsub.s32 %v210, %v996
    %v998 = vrot.slane %v778, %v997
    %v999 = vlaneseq
    %v1000 = vshrl.u32 %v999, 7
    %v1001 = vsub.s32 %v210, %v1000
    %v1002 = vrot.slane %v781, %v1001
    %v1003 = vlaneseq
    %v1004 = vshrl.u32 %v1003, 7
    %v1005 = vsub.s32 %v210, %v1004
    %v1006 = vrot.slane %v784, %v1005
    %v1007 = vlaneseq
    %v1008 = vshrl.u32 %v1007, 7
    %v1009 = vsub.s32 %v210, %v1008
    %v1010 = vrot.slane %v787, %v1009
    %v1011 = vlaneseq
    %v1012 = vshrl.u32 %v1011, 7
    %v1013 = vsub.s32 %v210, %v1012
    %v1014 = vrot.slane %v790, %v1013
    %v1015 = vlaneseq
    %v1016 = vshrl.u32 %v1015, 7
    %v1017 = vsub.s32 %v210, %v1016
    %v1018 = vrot.slane %v793, %v1017
    %v1019 = vlaneseq
    %v1020 = vshrl.u32 %v1019, 7
    %v1021 = vsub.s32 %v210, %v1020
    %v1022 = vrot.slane %v796, %v1021
    %v1023 = vlaneseq
    %v1024 = vshrl.u32 %v1023, 7
    %v1025 = vsub.s32 %v210, %v1024
    %v1026 = vrot.slane %v799, %v1025
    %v1027 = vlaneseq
    %v1028 = vshrl.u32 %v1027, 7
    %v1029 = vsub.s32 %v210, %v1028
    %v1030 = vrot.slane %v802, %v1029
    %v1031 = vlaneseq
    %v1032 = vshrl.u32 %v1031, 7
    %v1033 = vsub.s32 %v210, %v1032
    %v1034 = vrot.slane %v805, %v1033
    %v1035 = vlaneseq
    %v1036 = vshrl.u32 %v1035, 7
    %v1037 = vsub.s32 %v210, %v1036
    %v1038 = vrot.slane %v808, %v1037
    %v1039 = vlaneseq
    %v1040 = vshrl.u32 %v1039, 7
    %v1041 = vsub.s32 %v210, %v1040
    %v1042 = vrot.slane %v811, %v1041
    %v1043 = vlaneseq
    %v1044 = vshrl.u32 %v1043, 7
    %v1045 = vsub.s32 %v210, %v1044
    %v1046 = vrot.slane %v814, %v1045
    %v1047 = vlaneseq
    %v1048 = vshrl.u32 %v1047, 7
    %v1049 = vsub.s32 %v210, %v1048
    %v1050 = vrot.slane %v817, %v1049
    %v1051 = vlaneseq
    %v1052 = vshrl.u32 %v1051, 7
    %v1053 = vsub.s32 %v210, %v1052
    %v1054 = vrot.slane %v820, %v1053
    %v1055 = vlaneseq
    %v1056 = vshrl.u32 %v1055, 7
    %v1057 = vsub.s32 %v210, %v1056
    %v1058 = vrot.slane %v823, %v1057
    %v1059 = vlaneseq
    %v1060 = vshrl.u32 %v1059, 7
    %v1061 = vsub.s32 %v210, %v1060
    %v1062 = vrot.slane %v826, %v1061
    %v1063 = vlaneseq
    %v1064 = vshrl.u32 %v1063, 7
    %v1065 = vsub.s32 %v210, %v1064
    %v1066 = vrot.slane %v829, %v1065
    %v1067 = vlaneseq
    %v1068 = vshrl.u32 %v1067, 7
    %v1069 = vsub.s32 %v210, %v1068
    %v1070 = vrot.slane %v832, %v1069
    %v1071 = vlaneseq
    %v1072 = vshrl.u32 %v1071, 7
    %v1073 = vsub.s32 %v210, %v1072
    %v1074 = vrot.slane %v835, %v1073
    %v1075 = vlaneseq
    %v1076 = vshrl.u32 %v1075, 7
    %v1077 = vsub.s32 %v210, %v1076
    %v1078 = vrot.slane %v838, %v1077
    %v1079 = vlaneseq
    %v1080 = vshrl.u32 %v1079, 7
    %v1081 = vsub.s32 %v210, %v1080
    %v1082 = vrot.slane %v841, %v1081
    %v1083 = vlaneseq
    %v1084 = vshrl.u32 %v1083, 7
    %v1085 = vsub.s32 %v210, %v1084
    %v1086 = vrot.slane %v844, %v1085
    %v1087 = vlaneseq
    %v1088 = vshrl.u32 %v1087, 7
    %v1089 = vsub.s32 %v210, %v1088
    %v1090 = vrot.slane %v847, %v1089
    %v1091 = vlaneseq
    %v1092 = vshrl.u32 %v1091, 7
    %v1093 = vsub.s32 %v210, %v1092
    %v1094 = vrot.slane %v850, %v1093
    %v1095 = vlaneseq
    %v1096 = vshrl.u32 %v1095, 7
    %v1097 = vsub.s32 %v210, %v1096
    %v1098 = vrot.slane %v853, %v1097
    %v1099 = vlaneseq
    %v1100 = vshrl.u32 %v1099, 7
    %v1101 = vsub.s32 %v210, %v1100
    %v1102 = vrot.slane %v856, %v1101
    %v1103 = vlaneseq
    %v1104 = vshrl.u32 %v1103, 7
    %v1105 = vsub.s32 %v210, %v1104
    %v1106 = vrot.slane %v859, %v1105
    %v1107 = vlaneseq
    %v1108 = vshrl.u32 %v1107, 7
    %v1109 = vsub.s32 %v210, %v1108
    %v1110 = vrot.slane %v862, %v1109
    %v1111 = vlaneseq
    %v1112 = vshrl.u32 %v1111, 7
    %v1113 = vsub.s32 %v210, %v1112
    %v1114 = vrot.slane %v865, %v1113
    %v1115 = vlaneseq
    %v1116 = vshrl.u32 %v1115, 7
    %v1117 = vsub.s32 %v210, %v1116
    %v1118 = vrot.slane %v868, %v1117
    %v1119 = vlaneseq
    %v1120 = vshrl.u32 %v1119, 7
    %v1121 = vsub.s32 %v210, %v1120
    %v1122 = vrot.slane %v871, %v1121
    %v1123 = vlaneseq
    %v1124 = vshrl.u32 %v1123, 7
    %v1125 = vsub.s32 %v210, %v1124
    %v1126 = vrot.slane %v874, %v1125
    %v1127 = vlaneseq
    %v1128 = vshrl.u32 %v1127, 7
    %v1129 = vsub.s32 %v210, %v1128
    %v1130 = vrot.slane %v877, %v1129
    %v1131 = vlaneseq
    %v1132 = vshrl.u32 %v1131, 7
    %v1133 = vsub.s32 %v210, %v1132
    %v1134 = vrot.slane %v880, %v1133
    %v1135 = vlaneseq
    %v1136 = vshrl.u32 %v1135, 7
    %v1137 = vsub.s32 %v210, %v1136
    %v1138 = vrot.slane %v883, %v1137
    %v1139 = vlaneseq
    %v1140 = vshrl.u32 %v1139, 7
    %v1141 = vsub.s32 %v210, %v1140
    %v1142 = vrot.slane %v886, %v1141
    %v1143 = vsel %vm293, %v894, %v890
    %vm1144 = vcmask 1042434
    %v1145 = vsel %vm1144, %v898, %v1143
    %vm1146 = vcmask 1043459
    %v1147 = vsel %vm1146, %v902, %v1145
    %vm1148 = vcmask 1044484
    %v1149 = vsel %vm1148, %v906, %v1147
    %vm1150 = vcmask 1045509
    %v1151 = vsel %vm1150, %v910, %v1149
    %vm1152 = vcmask 1046534
    %v1153 = vsel %vm1152, %v914, %v1151
    %vm1154 = vcmask 1047559
    %v1155 = vsel %vm1154, %v918, %v1153
    %v1156 = vsel %vm293, %v926, %v922
    %v1157 = vsel %vm1144, %v930, %v1156
    %v1158 = vsel %vm1146, %v934, %v1157
    %v1159 = vsel %vm1148, %v938, %v1158
    %v1160 = vsel %vm1150, %v942, %v1159
    %v1161 = vsel %vm1152, %v946, %v1160
    %v1162 = vsel %vm1154, %v950, %v1161
    %v1163 = vsel %vm293, %v958, %v954
    %v1164 = vsel %vm1144, %v962, %v1163
    %v1165 = vsel %vm1146, %v966, %v1164
    %v1166 = vsel %vm1148, %v970, %v1165
    %v1167 = vsel %vm1150, %v974, %v1166
    %v1168 = vsel %vm1152, %v978, %v1167
    %v1169 = vsel %vm1154, %v982, %v1168
    %v1170 = vsel %vm293, %v990, %v986
    %v1171 = vsel %vm1144, %v994, %v1170
    %v1172 = vsel %vm1146, %v998, %v1171
    %v1173 = vsel %vm1148, %v1002, %v1172
    %v1174 = vsel %vm1150, %v1006, %v1173
    %v1175 = vsel %vm1152, %v1010, %v1174
    %v1176 = vsel %vm1154, %v1014, %v1175
    %v1177 = vsel %vm293, %v1022, %v1018
    %v1178 = vsel %vm1144, %v1026, %v1177
    %v1179 = vsel %vm1146, %v1030, %v1178
    %v1180 = vsel %vm1148, %v1034, %v1179
    %v1181 = vsel %vm1150, %v1038, %v1180
    %v1182 = vsel %vm1152, %v1042, %v1181
    %v1183 = vsel %vm1154, %v1046, %v1182
    %v1184 = vsel %vm293, %v1054, %v1050
    %v1185 = vsel %vm1144, %v1058, %v1184
    %v1186 = vsel %vm1146, %v1062, %v1185
    %v1187 = vsel %vm1148, %v1066, %v1186
    %v1188 = vsel %vm1150, %v1070, %v1187
    %v1189 = vsel %vm1152, %v1074, %v1188
    %v1190 = vsel %vm1154, %v1078, %v1189
    %v1191 = vsel %vm293, %v1086, %v1082
    %v1192 = vsel %vm1144, %v1090, %v1191
    %v1193 = vsel %vm1146, %v1094, %v1192
    %v1194 = vsel %vm1148, %v1098, %v1193
    %v1195 = vsel %vm1150, %v1102, %v1194
    %v1196 = vsel %vm1152, %v1106, %v1195
    %v1197 = vsel %vm1154, %v1110, %v1196
    %v1198 = vsel %vm293, %v1118, %v1114
    %v1199 = vsel %vm1144, %v1122, %v1198
    %v1200 = vsel %vm1146, %v1126, %v1199
    %v1201 = vsel %vm1148, %v1130, %v1200
    %v1202 = vsel %vm1150, %v1134, %v1201
    %v1203 = vsel %vm1152, %v1138, %v1202
    %v1204 = vsel %vm1154, %v1142, %v1203
    %vm1213 = vcmask 15360
    %v1214 = vsel %vm1213, %v1155, 0.0
    %1215 = vadd.xlane.f32.xlu0 %v1214
    %v1216 = vpop.xlane.xlu0 %1215
    %v1217 = vsel %vm1213, %v1162, 0.0
    %1218 = vadd.xlane.f32.xlu0 %v1217
    %v1219 = vpop.xlane.xlu0 %1218
    %v1220 = vsel %vm1213, %v1169, 0.0
    %1221 = vadd.xlane.f32.xlu0 %v1220
    %v1222 = vpop.xlane.xlu0 %1221
    %v1223 = vsel %vm1213, %v1176, 0.0
    %1224 = vadd.xlane.f32.xlu0 %v1223
    %v1225 = vpop.xlane.xlu0 %1224
    %v1226 = vsel %vm1213, %v1183, 0.0
    %1227 = vadd.xlane.f32.xlu0 %v1226
    %v1228 = vpop.xlane.xlu0 %1227
    %v1229 = vsel %vm1213, %v1190, 0.0
    %1230 = vadd.xlane.f32.xlu0 %v1229
    %v1231 = vpop.xlane.xlu0 %1230
    %v1232 = vsel %vm1213, %v1197, 0.0
    %1233 = vadd.xlane.f32.xlu0 %v1232
    %v1234 = vpop.xlane.xlu0 %1233
    %v1235 = vsel %vm1213, %v1204, 0.0
    %1236 = vadd.xlane.f32.xlu0 %v1235
    %v1237 = vpop.xlane.xlu0 %1236
    %v1238 = vxor.u32 %v1216, 2147483648
    %v1239 = vxor.u32 %v1219, 2147483648
    %v1240 = vxor.u32 %v1222, 2147483648
    %v1241 = vxor.u32 %v1225, 2147483648
    %v1242 = vxor.u32 %v1228, 2147483648
    %v1243 = vxor.u32 %v1231, 2147483648
    %v1244 = vxor.u32 %v1234, 2147483648
    %v1245 = vxor.u32 %v1237, 2147483648
    %v1246 = vmul.f32 %v1238, 1.442695
    %v1247 = vpow.pop %v1246
    %v1248 = vmul.f32 %v1239, 1.442695
    %v1249 = vpow.pop %v1248
    %v1250 = vmul.f32 %v1240, 1.442695
    %v1251 = vpow.pop %v1250
    %v1252 = vmul.f32 %v1241, 1.442695
    %v1253 = vpow.pop %v1252
    %v1254 = vmul.f32 %v1242, 1.442695
    %v1255 = vpow.pop %v1254
    %v1256 = vmul.f32 %v1243, 1.442695
    %v1257 = vpow.pop %v1256
    %v1258 = vmul.f32 %v1244, 1.442695
    %v1259 = vpow.pop %v1258
    %v1260 = vmul.f32 %v1245, 1.442695
    %v1261 = vpow.pop %v1260
    %v1262 = vadd.f32 %v1247, 1.0
    %v1263 = vadd.f32 %v1249, 1.0
    %v1264 = vadd.f32 %v1251, 1.0
    %v1265 = vadd.f32 %v1253, 1.0
    %v1266 = vadd.f32 %v1255, 1.0
    %v1267 = vadd.f32 %v1257, 1.0
    %v1268 = vadd.f32 %v1259, 1.0
    %v1269 = vadd.f32 %v1261, 1.0
    %v1270 = vrcp.pop %v1262
    %v1271 = vmul.f32 1.0, %v1270
    %v1272 = vrcp.pop %v1263
    %v1273 = vmul.f32 1.0, %v1272
    %v1274 = vrcp.pop %v1264
    %v1275 = vmul.f32 1.0, %v1274
    %v1276 = vrcp.pop %v1265
    %v1277 = vmul.f32 1.0, %v1276
    %v1278 = vrcp.pop %v1266
    %v1279 = vmul.f32 1.0, %v1278
    %v1280 = vrcp.pop %v1267
    %v1281 = vmul.f32 1.0, %v1280
    %v1282 = vrcp.pop %v1268
    %v1283 = vmul.f32 1.0, %v1282
    %v1284 = vrcp.pop %v1269
    %v1285 = vmul.f32 1.0, %v1284
    %v1286 = vmul.f32 %v29, %v1271
    %v1287 = vmul.f32 %v30, %v1271
    %v1288 = vmul.f32 %v31, %v1273
    %v1289 = vmul.f32 %v32, %v1273
    %v1290 = vmul.f32 %v33, %v1275
    %v1291 = vmul.f32 %v34, %v1275
    %v1292 = vmul.f32 %v35, %v1277
    %v1293 = vmul.f32 %v36, %v1277
    %v1294 = vmul.f32 %v37, %v1279
    %v1295 = vmul.f32 %v38, %v1279
    %v1296 = vmul.f32 %v39, %v1281
    %v1297 = vmul.f32 %v40, %v1281
    %v1298 = vmul.f32 %v41, %v1283
    %v1299 = vmul.f32 %v42, %v1283
    %v1300 = vmul.f32 %v43, %v1285
    %v1301 = vmul.f32 %v44, %v1285
    %1302 = vst [vmem:[#allocation5] sm:$0xff] %v1286
    %1303 = vst [vmem:[#allocation5 + $0x8] sm:$0xff] %v1287
    %1304 = vst [vmem:[#allocation5 + $0x10] sm:$0xff] %v1288
    %1305 = vst [vmem:[#allocation5 + $0x18] sm:$0xff] %v1289
    %1306 = vst [vmem:[#allocation5 + $0x20] sm:$0xff] %v1290
    %1307 = vst [vmem:[#allocation5 + $0x28] sm:$0xff] %v1291
    %1308 = vst [vmem:[#allocation5 + $0x30] sm:$0xff] %v1292
    %1309 = vst [vmem:[#allocation5 + $0x38] sm:$0xff] %v1293
    %1310 = vst [vmem:[#allocation5 + $0x40] sm:$0xff] %v1294
    %1311 = vst [vmem:[#allocation5 + $0x48] sm:$0xff] %v1295
    %1312 = vst [vmem:[#allocation5 + $0x50] sm:$0xff] %v1296
    %1313 = vst [vmem:[#allocation5 + $0x58] sm:$0xff] %v1297
    %1314 = vst [vmem:[#allocation5 + $0x60] sm:$0xff] %v1298
    %1315 = vst [vmem:[#allocation5 + $0x68] sm:$0xff] %v1299
    %1316 = vst [vmem:[#allocation5 + $0x70] sm:$0xff] %v1300
    %1317 = vst [vmem:[#allocation5 + $0x78] sm:$0xff] %v1301
    // Predicated region
    $region18: #{tpu_custom_call.1} parent=1 // pred_check
      _
    $region19: #{tpu_custom_call.1} parent=1 // pred_check_branch
      %1319 = sbr.rel (0) target = $region21
    $region20: #{tpu_custom_call.1} parent=1 // pred_region
      %s1321 = ssub.s32 2048, 2048
      %1322 = vsyncadd [#allocation4], %s1321
      %s1323 = sshll.u32 [#allocation5], 4
      %s1324 = int_to_ptr.vmem [resolvable:$true] %s1323
      %1329 = dma.vmem_to_hbm [thread:$0]  %s1324, 2048, %s3, [#allocation4], 256, 256, 16
    $region21: #{tpu_custom_call.1} parent=1 // pred_fallthru
      _
    // Predicated region
    $region22: #{tpu_custom_call.1} parent=1 // pred_check
      _
    $region23: #{tpu_custom_call.1} parent=1 // pred_check_branch
      %1331 = sbr.rel (0) target = $region25
    $region24: #{tpu_custom_call.1} parent=1 // pred_region
      %1332 = dma.done [#allocation4], 2048
    $region25: #{tpu_custom_call.1} parent=1 // pred_fallthru
      _
    %1333 = vsyncpa [#allocation3], 1
    %1334 = vsyncpa [#allocation4], 1

</llo_original>
